<compile_context>
chip_gen: v7x
topology: tpu7x:2x2x1
jax: 0.10.0
libtpu: 0.0.40
codegen_flags: <defaults>
</compile_context>

<pallas_src>
import functools

import jax
import jax.numpy as jnp
from jax.experimental import pallas as pl
from jax.experimental.pallas import tpu as pltpu


def _round_up(x: int, m: int) -> int:
    return ((x + m - 1) // m) * m


_LANE_CANDIDATES = (1024, 896, 768, 640, 512, 384, 256, 128)
_TARGET_BLOCK_BYTES = 2 * 1024 * 1024   # per input per grid step
_MAX_TR = 512                           # caps the in-kernel chunk unroll at 64
_NUM_SHARDS = 2                         # "parallel" row shards (v7x has 2 TCs)


def _huber_kernel(yp_ref, y_ref, o_ref, *, inv_delta, valid_rows, tr, cr, steps):
    s = pl.program_id(0)          # parallel shard (TensorCore) index
    i = pl.program_id(1)          # sequential row-block index within the shard

    @pl.when(i == 0)
    def _init():
        o_ref[...] = jnp.zeros_like(o_ref)

    tf = yp_ref.shape[-1]
    blk = s * steps + i           # logical row-block index (may run past the end)
    row_base = blk * tr
    iota = jax.lax.broadcasted_iota(jnp.int32, (cr, 1), 0)

    # Stream the block in native-sublane-sized chunks: keeps intermediates in
    # vregs (no full-block spills) and upcasts to f32 only inside the kernel.
    part = jnp.zeros((cr, tf), jnp.float32)
    for r0 in range(0, tr, cr):   # static unroll
        yp = yp_ref[r0:r0 + cr, :].astype(jnp.float32)
        yv = y_ref[r0:r0 + cr, :].astype(jnp.float32)
        d = (yv - yp) * inv_delta
        t = jnp.sqrt(1.0 + d * d) - 1.0          # same formula as the PyTorch module
        valid = (row_base + r0 + iota) < valid_rows
        part = part + jnp.where(valid, t, 0.0)   # masked rows contribute 0

    # Fold the chunk accumulator down to 8 sublane rows (pure VALU adds); the
    # cross-sublane / cross-lane reduce happens once, outside the kernel.
    folded = part[0:8, :]
    for r0 in range(8, cr, 8):
        folded = folded + part[r0:r0 + 8, :]
    o_ref[...] += folded


def pseudo_huber_loss(y_prim, y, delta):
    """Pseudo-Huber loss, mean over all elements. Returns a float32 scalar."""
    assert y_prim.shape == y.shape, "y_prim and y must have identical shapes"
    count = int(y.size)
    if count == 0:
        return jnp.array(jnp.nan, dtype=jnp.float32)   # matches torch.mean of empty

    itemsize = max(jnp.dtype(y_prim.dtype).itemsize, jnp.dtype(y.dtype).itemsize)
    cr = 32 if itemsize <= 1 else (16 if itemsize == 2 else 8)   # chunk rows

    # ---- choose a copy-free lane-dense 2-D view (native dtype, no pad) ----
    tf = next((c for c in _LANE_CANDIDATES if count % c == 0), None)
    if tf is not None:
        rows = count // tf
        yp2, y2 = y_prim.reshape(rows, tf), y.reshape(rows, tf)    # free reshape
    elif (y.ndim >= 2 and y.shape[-1] >= 128
          and y.shape[-1] * itemsize * 32 <= 2 * 1024 * 1024):
        tf = int(y.shape[-1])                                      # last dim as lanes
        rows = count // tf
        yp2, y2 = y_prim.reshape(rows, tf), y.reshape(rows, tf)    # free reshape
    else:
        # Rare awkward shape (e.g. 1-D prime length): one pad copy; padded
        # zeros have y == y_prim == 0 and contribute exactly 0 to the sum.
        tf = 512
        rows = -(-count // tf)
        pad = rows * tf - count
        yp2 = jnp.pad(y_prim.reshape(-1), (0, pad)).reshape(rows, tf)
        y2 = jnp.pad(y.reshape(-1), (0, pad)).reshape(rows, tf)

    # ---- block / grid geometry --------------------------------------------
    tr = (_TARGET_BLOCK_BYTES // max(tf * itemsize, 1)) // 32 * 32
    tr = max(32, min(tr, _MAX_TR, _round_up(rows, 32)))
    nb = -(-rows // tr)                       # number of row blocks
    nshards = _NUM_SHARDS if nb > 1 else 1
    steps = -(-nb // nshards)

    kernel = functools.partial(
        _huber_kernel,
        inv_delta=1.0 / float(delta),
        valid_rows=rows, tr=tr, cr=cr, steps=steps)

    last_blk = nb - 1
    # Clamp so an extra shard-tail block never indexes past the array; its
    # contribution is fully masked in-kernel via the (unclamped) logical rows.
    in_map = lambda s, i: (jnp.minimum(s * steps + i, last_blk), 0)

    partials = pl.pallas_call(
        kernel,
        out_shape=jax.ShapeDtypeStruct((nshards * 8, tf), jnp.float32),
        grid=(nshards, steps),
        in_specs=[pl.BlockSpec((tr, tf), in_map),
                  pl.BlockSpec((tr, tf), in_map)],
        out_specs=pl.BlockSpec((8, tf), lambda s, i: (s, 0)),
        compiler_params=pltpu.CompilerParams(
            dimension_semantics=("parallel", "arbitrary")),
    )(yp2, y2)

    scale = (float(delta) ** 2) / float(count)
    return (scale * jnp.sum(partials)).astype(jnp.float32)


def _reference(y_prim, y, delta):
    return jnp.mean(delta ** 2 * (jnp.sqrt(1.0 + ((y - y_prim) / delta) ** 2) - 1.0))


if __name__ == "__main__":
    key = jax.random.PRNGKey(0)
    k1, k2, k3, k4, k5, k6 = jax.random.split(key, 6)

    # Test 1: batch=2, channels=4, 16x16 spatial (count divisible -> lane-dense view).
    delta = 1.0
    yp = jax.random.normal(k1, (2, 4, 16, 16), dtype=jnp.float32)
    yy = jax.random.normal(k2, (2, 4, 16, 16), dtype=jnp.float32)
    out = jax.block_until_ready(pseudo_huber_loss(yp, yy, delta))
    ref = _reference(yp, yy, delta)
    assert jnp.allclose(out, ref, rtol=1e-5, atol=1e-6), (out, ref)

    # Test 2: ragged shape -> copy-free collapsed (R, C) layout + in-kernel row mask.
    delta2 = 2.5
    yp2 = jax.random.normal(k3, (50, 300), dtype=jnp.float32)
    yy2 = jax.random.normal(k4, (50, 300), dtype=jnp.float32)
    out2 = jax.block_until_ready(pseudo_huber_loss(yp2, yy2, delta2))
    ref2 = _reference(yp2, yy2, delta2)
    assert jnp.allclose(out2, ref2, rtol=1e-5, atol=1e-6), (out2, ref2)

    # Test 3: bf16 inputs stay bf16 in HBM; upcast to f32 happens inside the kernel.
    delta3 = 0.5
    yp3 = jax.random.normal(k5, (4, 8, 128), dtype=jnp.float32).astype(jnp.bfloat16)
    yy3 = jax.random.normal(k6, (4, 8, 128), dtype=jnp.float32).astype(jnp.bfloat16)
    out3 = jax.block_until_ready(pseudo_huber_loss(yp3, yy3, delta3))
    ref3 = _reference(yp3.astype(jnp.float32), yy3.astype(jnp.float32), delta3)
    assert jnp.allclose(out3, ref3, rtol=1e-5, atol=1e-6), (out3, ref3)

    print("KERNEL_OK")
</pallas_src>

<mosaic_0001>
module attributes {stable_mosaic.version = 11 : i64} {
  func.func @_huber_kernel(%arg0: i32, %arg1: i32, %arg2: memref<32x1024xf32, #tpu.memory_space<vmem>>, %arg3: memref<32x1024xf32, #tpu.memory_space<vmem>>, %arg4: memref<8x1024xf32, #tpu.memory_space<vmem>>) attributes {dimension_semantics = [#tpu.dimension_semantics<parallel>, #tpu.dimension_semantics<arbitrary>], iteration_bounds = array<i64: 1, 1>, scalar_prefetch = 0 : i64, scratch_operands = 0 : i64, tpu.core_type = #tpu.core_type<tc>, window_params = [{transform_indices = @transform_0, window_bounds = array<i64: 32, 1024>}, {transform_indices = @transform_1, window_bounds = array<i64: 32, 1024>}, {transform_indices = @transform_2, window_bounds = array<i64: 8, 1024>}]} {
    %c0_i32 = arith.constant 0 : i32
    %0 = arith.cmpi eq, %arg1, %c0_i32 : i32
    %1 = arith.extui %0 : i1 to i32
    %c0_i32_0 = arith.constant 0 : i32
    %2 = arith.cmpi ne, %1, %c0_i32_0 : i32
    scf.if %2 {
      %cst_37 = arith.constant 0.000000e+00 : f32
      %95 = vector.broadcast %cst_37 : f32 to vector<8x1024xf32>
      %c0_38 = arith.constant 0 : index
      %c0_39 = arith.constant 0 : index
      %96 = vector.load %arg4[%c0_38, %c0_39] : memref<8x1024xf32, #tpu.memory_space<vmem>>, vector<8x1024xf32>
      tpu.vector_store %arg4[%c0_38, %c0_39], %95 {strides = array<i32>} : memref<8x1024xf32, #tpu.memory_space<vmem>>, vector<8x1024xf32>,
    } else {
    }
    %c1_i32 = arith.constant 1 : i32
    %3 = arith.muli %arg0, %c1_i32 : i32
    %4 = arith.addi %3, %arg1 : i32
    %c32_i32 = arith.constant 32 : i32
    %5 = arith.muli %4, %c32_i32 : i32
    %6 = tpu.iota {dimensions = array<i32: 0>} : vector<8x1xi32>
    %cst = arith.constant 0.000000e+00 : f32
    %7 = vector.broadcast %cst : f32 to vector<8x1024xf32>
    %c0 = arith.constant 0 : index
    %c0_1 = arith.constant 0 : index
    %8 = vector.load %arg2[%c0, %c0_1] : memref<32x1024xf32, #tpu.memory_space<vmem>>, vector<8x1024xf32>
    %c0_2 = arith.constant 0 : index
    %c0_3 = arith.constant 0 : index
    %9 = vector.load %arg3[%c0_2, %c0_3] : memref<32x1024xf32, #tpu.memory_space<vmem>>, vector<8x1024xf32>
    %10 = arith.subf %9, %8 : vector<8x1024xf32>
    %cst_4 = arith.constant 1.000000e+00 : f32
    %11 = vector.broadcast %cst_4 : f32 to vector<8x1024xf32>
    %12 = arith.mulf %10, %11 : vector<8x1024xf32>
    %13 = arith.mulf %12, %12 : vector<8x1024xf32>
    %cst_5 = arith.constant 1.000000e+00 : f32
    %14 = vector.broadcast %cst_5 : f32 to vector<8x1024xf32>
    %15 = arith.addf %14, %13 : vector<8x1024xf32>
    %16 = math.sqrt %15 : vector<8x1024xf32>
    %cst_6 = arith.constant 1.000000e+00 : f32
    %17 = vector.broadcast %cst_6 : f32 to vector<8x1024xf32>
    %18 = arith.subf %16, %17 : vector<8x1024xf32>
    %c0_i32_7 = arith.constant 0 : i32
    %19 = arith.addi %5, %c0_i32_7 : i32
    %20 = vector.broadcast %19 : i32 to vector<8x1xi32>
    %21 = arith.addi %20, %6 : vector<8x1xi32>
    %c2_i32 = arith.constant 2 : i32
    %22 = vector.broadcast %c2_i32 : i32 to vector<8x1xi32>
    %23 = arith.cmpi slt, %21, %22 : vector<8x1xi32>
    %cst_8 = arith.constant 0.000000e+00 : f32
    %24 = vector.shape_cast %23 : vector<8x1xi1> to vector<8x1xi1>
    %25 = vector.broadcast %24 : vector<8x1xi1> to vector<8x1024xi1>
    %26 = vector.broadcast %cst_8 : f32 to vector<8x1024xf32>
    %27 = arith.select %25, %18, %26 : vector<8x1024xi1>, vector<8x1024xf32>
    %28 = arith.addf %7, %27 : vector<8x1024xf32>
    %c8 = arith.constant 8 : index
    %c0_9 = arith.constant 0 : index
    %29 = vector.load %arg2[%c8, %c0_9] : memref<32x1024xf32, #tpu.memory_space<vmem>>, vector<8x1024xf32>
    %c8_10 = arith.constant 8 : index
    %c0_11 = arith.constant 0 : index
    %30 = vector.load %arg3[%c8_10, %c0_11] : memref<32x1024xf32, #tpu.memory_space<vmem>>, vector<8x1024xf32>
    %31 = arith.subf %30, %29 : vector<8x1024xf32>
    %cst_12 = arith.constant 1.000000e+00 : f32
    %32 = vector.broadcast %cst_12 : f32 to vector<8x1024xf32>
    %33 = arith.mulf %31, %32 : vector<8x1024xf32>
    %34 = arith.mulf %33, %33 : vector<8x1024xf32>
    %cst_13 = arith.constant 1.000000e+00 : f32
    %35 = vector.broadcast %cst_13 : f32 to vector<8x1024xf32>
    %36 = arith.addf %35, %34 : vector<8x1024xf32>
    %37 = math.sqrt %36 : vector<8x1024xf32>
    %cst_14 = arith.constant 1.000000e+00 : f32
    %38 = vector.broadcast %cst_14 : f32 to vector<8x1024xf32>
    %39 = arith.subf %37, %38 : vector<8x1024xf32>
    %c8_i32 = arith.constant 8 : i32
    %40 = arith.addi %5, %c8_i32 : i32
    %41 = vector.broadcast %40 : i32 to vector<8x1xi32>
    %42 = arith.addi %41, %6 : vector<8x1xi32>
    %c2_i32_15 = arith.constant 2 : i32
    %43 = vector.broadcast %c2_i32_15 : i32 to vector<8x1xi32>
    %44 = arith.cmpi slt, %42, %43 : vector<8x1xi32>
    %cst_16 = arith.constant 0.000000e+00 : f32
    %45 = vector.shape_cast %44 : vector<8x1xi1> to vector<8x1xi1>
    %46 = vector.broadcast %45 : vector<8x1xi1> to vector<8x1024xi1>
    %47 = vector.broadcast %cst_16 : f32 to vector<8x1024xf32>
    %48 = arith.select %46, %39, %47 : vector<8x1024xi1>, vector<8x1024xf32>
    %49 = arith.addf %28, %48 : vector<8x1024xf32>
    %c16 = arith.constant 16 : index
    %c0_17 = arith.constant 0 : index
    %50 = vector.load %arg2[%c16, %c0_17] : memref<32x1024xf32, #tpu.memory_space<vmem>>, vector<8x1024xf32>
    %c16_18 = arith.constant 16 : index
    %c0_19 = arith.constant 0 : index
    %51 = vector.load %arg3[%c16_18, %c0_19] : memref<32x1024xf32, #tpu.memory_space<vmem>>, vector<8x1024xf32>
    %52 = arith.subf %51, %50 : vector<8x1024xf32>
    %cst_20 = arith.constant 1.000000e+00 : f32
    %53 = vector.broadcast %cst_20 : f32 to vector<8x1024xf32>
    %54 = arith.mulf %52, %53 : vector<8x1024xf32>
    %55 = arith.mulf %54, %54 : vector<8x1024xf32>
    %cst_21 = arith.constant 1.000000e+00 : f32
    %56 = vector.broadcast %cst_21 : f32 to vector<8x1024xf32>
    %57 = arith.addf %56, %55 : vector<8x1024xf32>
    %58 = math.sqrt %57 : vector<8x1024xf32>
    %cst_22 = arith.constant 1.000000e+00 : f32
    %59 = vector.broadcast %cst_22 : f32 to vector<8x1024xf32>
    %60 = arith.subf %58, %59 : vector<8x1024xf32>
    %c16_i32 = arith.constant 16 : i32
    %61 = arith.addi %5, %c16_i32 : i32
    %62 = vector.broadcast %61 : i32 to vector<8x1xi32>
    %63 = arith.addi %62, %6 : vector<8x1xi32>
    %c2_i32_23 = arith.constant 2 : i32
    %64 = vector.broadcast %c2_i32_23 : i32 to vector<8x1xi32>
    %65 = arith.cmpi slt, %63, %64 : vector<8x1xi32>
    %cst_24 = arith.constant 0.000000e+00 : f32
    %66 = vector.shape_cast %65 : vector<8x1xi1> to vector<8x1xi1>
    %67 = vector.broadcast %66 : vector<8x1xi1> to vector<8x1024xi1>
    %68 = vector.broadcast %cst_24 : f32 to vector<8x1024xf32>
    %69 = arith.select %67, %60, %68 : vector<8x1024xi1>, vector<8x1024xf32>
    %70 = arith.addf %49, %69 : vector<8x1024xf32>
    %c24 = arith.constant 24 : index
    %c0_25 = arith.constant 0 : index
    %71 = vector.load %arg2[%c24, %c0_25] : memref<32x1024xf32, #tpu.memory_space<vmem>>, vector<8x1024xf32>
    %c24_26 = arith.constant 24 : index
    %c0_27 = arith.constant 0 : index
    %72 = vector.load %arg3[%c24_26, %c0_27] : memref<32x1024xf32, #tpu.memory_space<vmem>>, vector<8x1024xf32>
    %73 = arith.subf %72, %71 : vector<8x1024xf32>
    %cst_28 = arith.constant 1.000000e+00 : f32
    %74 = vector.broadcast %cst_28 : f32 to vector<8x1024xf32>
    %75 = arith.mulf %73, %74 : vector<8x1024xf32>
    %76 = arith.mulf %75, %75 : vector<8x1024xf32>
    %cst_29 = arith.constant 1.000000e+00 : f32
    %77 = vector.broadcast %cst_29 : f32 to vector<8x1024xf32>
    %78 = arith.addf %77, %76 : vector<8x1024xf32>
    %79 = math.sqrt %78 : vector<8x1024xf32>
    %cst_30 = arith.constant 1.000000e+00 : f32
    %80 = vector.broadcast %cst_30 : f32 to vector<8x1024xf32>
    %81 = arith.subf %79, %80 : vector<8x1024xf32>
    %c24_i32 = arith.constant 24 : i32
    %82 = arith.addi %5, %c24_i32 : i32
    %83 = vector.broadcast %82 : i32 to vector<8x1xi32>
    %84 = arith.addi %83, %6 : vector<8x1xi32>
    %c2_i32_31 = arith.constant 2 : i32
    %85 = vector.broadcast %c2_i32_31 : i32 to vector<8x1xi32>
    %86 = arith.cmpi slt, %84, %85 : vector<8x1xi32>
    %cst_32 = arith.constant 0.000000e+00 : f32
    %87 = vector.shape_cast %86 : vector<8x1xi1> to vector<8x1xi1>
    %88 = vector.broadcast %87 : vector<8x1xi1> to vector<8x1024xi1>
    %89 = vector.broadcast %cst_32 : f32 to vector<8x1024xf32>
    %90 = arith.select %88, %81, %89 : vector<8x1024xi1>, vector<8x1024xf32>
    %91 = arith.addf %70, %90 : vector<8x1024xf32>
    %c0_33 = arith.constant 0 : index
    %c0_34 = arith.constant 0 : index
    %92 = vector.load %arg4[%c0_33, %c0_34] : memref<8x1024xf32, #tpu.memory_space<vmem>>, vector<8x1024xf32>
    %93 = arith.addf %92, %91 : vector<8x1024xf32>
    %c0_35 = arith.constant 0 : index
    %c0_36 = arith.constant 0 : index
    %94 = vector.load %arg4[%c0_35, %c0_36] : memref<8x1024xf32, #tpu.memory_space<vmem>>, vector<8x1024xf32>
    tpu.vector_store %arg4[%c0_35, %c0_36], %93 {strides = array<i32>} : memref<8x1024xf32, #tpu.memory_space<vmem>>, vector<8x1024xf32>,
    return
  }
  func.func @transform_0(%arg0: i32, %arg1: i32) -> (i32, i32) {
    %c1_i32 = arith.constant 1 : i32
    %0 = arith.muli %arg0, %c1_i32 : i32
    %1 = arith.addi %0, %arg1 : i32
    %c0_i32 = arith.constant 0 : i32
    %2 = arith.minsi %1, %c0_i32 : i32
    %c0_i32_0 = arith.constant 0 : i32
    %c0_i32_1 = arith.constant 0 : i32
    return %2, %c0_i32_0 : i32, i32
  }
  func.func @transform_1(%arg0: i32, %arg1: i32) -> (i32, i32) {
    %c1_i32 = arith.constant 1 : i32
    %0 = arith.muli %arg0, %c1_i32 : i32
    %1 = arith.addi %0, %arg1 : i32
    %c0_i32 = arith.constant 0 : i32
    %2 = arith.minsi %1, %c0_i32 : i32
    %c0_i32_0 = arith.constant 0 : i32
    %c0_i32_1 = arith.constant 0 : i32
    return %2, %c0_i32_0 : i32, i32
  }
  func.func @transform_2(%arg0: i32, %arg1: i32) -> (i32, i32) {
    %c0_i32 = arith.constant 0 : i32
    %c0_i32_0 = arith.constant 0 : i32
    return %arg0, %c0_i32 : i32, i32
  }
}

</mosaic_0001>

<llo_original>
// kernel: tpu_custom_call.1
$region0: #{tpu_custom_call.1}
  #allocation0 [shape = 'u32[]', space=smem, size = 0x4, offset = 0x4, fixed_abs, tag = 'smem constant byte address 0x4 - core index']
  #allocation1 [shape = 'u32[144,128]{1,0:T(1,128)}', space=vmem, size = 0x12000, scoped, tag = 'internal scratch']
  %s0 = inlined_call_operand.hbm [shape: f32[2,1024], index: 0, kind: input, shape index: {}]
  %s1 = inlined_call_operand.hbm [shape: f32[2,1024], index: 1, kind: input, shape index: {}]
  %s2 = inlined_call_operand.hbm [shape: f32[8,1024], index: 2, kind: output, shape index: {}]
  %s3 = sld [smem:[#allocation0]]
  $region30: #{tpu_custom_call.1} parent=0
    _
  %s5 = ssub.s32 1, %s3
  %s6 = scalar_select 0, %s5, %s3
  $region1: #{tpu_custom_call.1} parent=0
    #allocation2 [shape = 'u8[131072]{0}', space=vmem, size = 0x20000, scoped, tag = 'input window, operand 0, single buffered']
    #allocation3 [shape = 's32[1]{0}', space=sflag, size = 0x4, scoped, tag = 'scoped memory for tpu_custom_call.1']
    #allocation4 [shape = 's32[1]{0}', space=sflag, size = 0x4, scoped, tag = 'scoped memory for tpu_custom_call.1']
    #allocation5 [shape = 'u8[131072]{0}', space=vmem, size = 0x20000, scoped, tag = 'input window, operand 1, single buffered']
    #allocation6 [shape = 's32[1]{0}', space=sflag, size = 0x4, scoped, tag = 'scoped memory for tpu_custom_call.1']
    #allocation7 [shape = 'u8[32768]{0}', space=vmem, size = 0x8000, scoped, tag = 'output window, operand 0, single buffered']
    %7 = vsyncpa [#allocation3], 0
    %8 = vsyncpa [#allocation6], 0
    %9 = vsyncpa [#allocation4], 0
    // Predicated region
    $region2: #{tpu_custom_call.1} parent=1 // pred_check
      _
    $region3: #{tpu_custom_call.1} parent=1 // pred_check_branch
      %11 = sbr.rel (0) target = $region5
    $region4: #{tpu_custom_call.1} parent=1 // pred_region
      %s12 = sadd.s32 0, 0
      %p13 = scmp.lt.s32.totalorder %s12, 0
      %s14 = scalar_select %p13, %s12, 0
      %s15 = smul.u32 16, %s14
      %s16 = ssub.s32 1, %s15
      %s17 = smul.u32 32, %s16
      %s18 = smul.u32 %s17, 8
      %s20 = ssub.s32 4096, %s18
      %21 = vsyncadd [#allocation3], %s20
      %p22 = scmp.ne.s32.totalorder 0, %s18
      %s23 = smul.addr %s15, 8
      %s24 = smul.addr %s23, 32
      %s25 = scalar_lea.hbm %s0, %s24
      %s26 = smul.u32 16, %s16
      %s27 = sshll.u32 [#allocation2], 4
      %s28 = int_to_ptr.vmem [resolvable:$true] %s27
      %s29 = sshll.u32 %s26, 4
      %33 = dma.hbm_to_vmem [thread:$0]  (%p22), %s25, %s29, %s28, [#allocation3], 256, 256, 16
    $region5: #{tpu_custom_call.1} parent=1 // pred_fallthru
      _
    // Predicated region
    $region6: #{tpu_custom_call.1} parent=1 // pred_check
      _
    $region7: #{tpu_custom_call.1} parent=1 // pred_check_branch
      %35 = sbr.rel (0) target = $region9
    $region8: #{tpu_custom_call.1} parent=1 // pred_region
      %s36 = sadd.s32 0, 0
      %p37 = scmp.lt.s32.totalorder %s36, 0
      %s38 = scalar_select %p37, %s36, 0
      %s39 = smul.u32 16, %s38
      %s40 = ssub.s32 1, %s39
      %s41 = smul.u32 32, %s40
      %s42 = smul.u32 %s41, 8
      %s44 = ssub.s32 4096, %s42
      %45 = vsyncadd [#allocation6], %s44
      %p46 = scmp.ne.s32.totalorder 0, %s42
      %s47 = smul.addr %s39, 8
      %s48 = smul.addr %s47, 32
      %s49 = scalar_lea.hbm %s1, %s48
      %s50 = smul.u32 16, %s40
      %s51 = sshll.u32 [#allocation5], 4
      %s52 = int_to_ptr.vmem [resolvable:$true] %s51
      %s53 = sshll.u32 %s50, 4
      %57 = dma.hbm_to_vmem [thread:$0]  (%p46), %s49, %s53, %s52, [#allocation6], 256, 256, 16
    $region9: #{tpu_custom_call.1} parent=1 // pred_fallthru
      _
    // Predicated region
    $region10: #{tpu_custom_call.1} parent=1 // pred_check
      _
    $region11: #{tpu_custom_call.1} parent=1 // pred_check_branch
      %59 = sbr.rel (0) target = $region13
    $region12: #{tpu_custom_call.1} parent=1 // pred_region
      %60 = dma.done [#allocation3], 4096
    $region13: #{tpu_custom_call.1} parent=1 // pred_fallthru
      _
    // Predicated region
    $region14: #{tpu_custom_call.1} parent=1 // pred_check
      _
    $region15: #{tpu_custom_call.1} parent=1 // pred_check_branch
      %62 = sbr.rel (0) target = $region17
    $region16: #{tpu_custom_call.1} parent=1 // pred_region
      %63 = dma.done [#allocation6], 4096
    $region17: #{tpu_custom_call.1} parent=1 // pred_fallthru
      _
    %s64 = sadd.s32 0, 0
    %p65 = scmp.lt.s32.totalorder %s64, 0
    %s66 = scalar_select %p65, %s64, 0
    %s67 = smul.u32 16, %s66
    %s68 = ssub.s32 1, %s67
    %s69 = smul.u32 32, %s68
    %s70 = smul.u32 %s69, 8
    %s71 = sadd.s32 0, 0
    %p72 = scmp.lt.s32.totalorder %s71, 0
    %s73 = scalar_select %p72, %s71, 0
    %s74 = smul.u32 16, %s73
    %s75 = ssub.s32 1, %s74
    %s76 = smul.u32 32, %s75
    %s77 = smul.u32 %s76, 8
    %p78 = scmp.eq.s32.totalorder 0, 0
    // Predicated region
    $region18: #{tpu_custom_call.1} parent=1 // pred_check
      %p79 = pneg %p78
    $region19: #{tpu_custom_call.1} parent=1 // pred_check_branch
      %81 = sbr.rel (%p79) target = $region21
    $region20: #{tpu_custom_call.1} parent=1 // pred_region
      %82 = vst [vmem:[#allocation7] sm:$0xff] 0.0
      %83 = vst [vmem:[#allocation7 + $0x8] sm:$0xff] 0.0
      %84 = vst [vmem:[#allocation7 + $0x10] sm:$0xff] 0.0
      %85 = vst [vmem:[#allocation7 + $0x18] sm:$0xff] 0.0
      %86 = vst [vmem:[#allocation7 + $0x20] sm:$0xff] 0.0
      %87 = vst [vmem:[#allocation7 + $0x28] sm:$0xff] 0.0
      %88 = vst [vmem:[#allocation7 + $0x30] sm:$0xff] 0.0
      %89 = vst [vmem:[#allocation7 + $0x38] sm:$0xff] 0.0
    $region21: #{tpu_custom_call.1} parent=1 // pred_fallthru
      _
    %s90 = sadd.s32 0, 0
    %s91 = smul.u32 %s90, 32
    %v92 = vlaneseq
    %v93 = vshrl.u32 %v92, 7
    %v94 = vld [vmem:[#allocation2] sm:$0xff]
    %v95 = vld [vmem:[#allocation2 + $0x8] sm:$0xff]
    %v96 = vld [vmem:[#allocation2 + $0x10] sm:$0xff]
    %v97 = vld [vmem:[#allocation2 + $0x18] sm:$0xff]
    %v98 = vld [vmem:[#allocation2 + $0x20] sm:$0xff]
    %v99 = vld [vmem:[#allocation2 + $0x28] sm:$0xff]
    %v100 = vld [vmem:[#allocation2 + $0x30] sm:$0xff]
    %v101 = vld [vmem:[#allocation2 + $0x38] sm:$0xff]
    %v102 = vld [vmem:[#allocation5] sm:$0xff]
    %v103 = vld [vmem:[#allocation5 + $0x8] sm:$0xff]
    %v104 = vld [vmem:[#allocation5 + $0x10] sm:$0xff]
    %v105 = vld [vmem:[#allocation5 + $0x18] sm:$0xff]
    %v106 = vld [vmem:[#allocation5 + $0x20] sm:$0xff]
    %v107 = vld [vmem:[#allocation5 + $0x28] sm:$0xff]
    %v108 = vld [vmem:[#allocation5 + $0x30] sm:$0xff]
    %v109 = vld [vmem:[#allocation5 + $0x38] sm:$0xff]
    %v110 = vsub.f32 %v102, %v94
    %v111 = vsub.f32 %v103, %v95
    %v112 = vsub.f32 %v104, %v96
    %v113 = vsub.f32 %v105, %v97
    %v114 = vsub.f32 %v106, %v98
    %v115 = vsub.f32 %v107, %v99
    %v116 = vsub.f32 %v108, %v100
    %v117 = vsub.f32 %v109, %v101
    %v118 = vmul.f32 %v110, %v110
    %v119 = vmul.f32 %v111, %v111
    %v120 = vmul.f32 %v112, %v112
    %v121 = vmul.f32 %v113, %v113
    %v122 = vmul.f32 %v114, %v114
    %v123 = vmul.f32 %v115, %v115
    %v124 = vmul.f32 %v116, %v116
    %v125 = vmul.f32 %v117, %v117
    %v126 = vadd.f32 %v118, 1.0
    %v127 = vadd.f32 %v119, 1.0
    %v128 = vadd.f32 %v120, 1.0
    %v129 = vadd.f32 %v121, 1.0
    %v130 = vadd.f32 %v122, 1.0
    %v131 = vadd.f32 %v123, 1.0
    %v132 = vadd.f32 %v124, 1.0
    %v133 = vadd.f32 %v125, 1.0
    %v134 = vrsqrt.pop %v126
    %v135 = vmul.f32 %v126, %v134
    %vm136 = vcmp.eq.f32.partialorder %v126, inf
    %v137 = vsel %vm136, %v126, %v135
    %vm138 = vcmp.eq.f32.partialorder %v126, 0.0
    %v139 = vand.u32 %v126, 2147483648
    %v140 = vsel %vm138, %v139, %v137
    %v141 = vrsqrt.pop %v127
    %v142 = vmul.f32 %v127, %v141
    %vm143 = vcmp.eq.f32.partialorder %v127, inf
    %v144 = vsel %vm143, %v127, %v142
    %vm145 = vcmp.eq.f32.partialorder %v127, 0.0
    %v146 = vand.u32 %v127, 2147483648
    %v147 = vsel %vm145, %v146, %v144
    %v148 = vrsqrt.pop %v128
    %v149 = vmul.f32 %v128, %v148
    %vm150 = vcmp.eq.f32.partialorder %v128, inf
    %v151 = vsel %vm150, %v128, %v149
    %vm152 = vcmp.eq.f32.partialorder %v128, 0.0
    %v153 = vand.u32 %v128, 2147483648
    %v154 = vsel %vm152, %v153, %v151
    %v155 = vrsqrt.pop %v129
    %v156 = vmul.f32 %v129, %v155
    %vm157 = vcmp.eq.f32.partialorder %v129, inf
    %v158 = vsel %vm157, %v129, %v156
    %vm159 = vcmp.eq.f32.partialorder %v129, 0.0
    %v160 = vand.u32 %v129, 2147483648
    %v161 = vsel %vm159, %v160, %v158
    %v162 = vrsqrt.pop %v130
    %v163 = vmul.f32 %v130, %v162
    %vm164 = vcmp.eq.f32.partialorder %v130, inf
    %v165 = vsel %vm164, %v130, %v163
    %vm166 = vcmp.eq.f32.partialorder %v130, 0.0
    %v167 = vand.u32 %v130, 2147483648
    %v168 = vsel %vm166, %v167, %v165
    %v169 = vrsqrt.pop %v131
    %v170 = vmul.f32 %v131, %v169
    %vm171 = vcmp.eq.f32.partialorder %v131, inf
    %v172 = vsel %vm171, %v131, %v170
    %vm173 = vcmp.eq.f32.partialorder %v131, 0.0
    %v174 = vand.u32 %v131, 2147483648
    %v175 = vsel %vm173, %v174, %v172
    %v176 = vrsqrt.pop %v132
    %v177 = vmul.f32 %v132, %v176
    %vm178 = vcmp.eq.f32.partialorder %v132, inf
    %v179 = vsel %vm178, %v132, %v177
    %vm180 = vcmp.eq.f32.partialorder %v132, 0.0
    %v181 = vand.u32 %v132, 2147483648
    %v182 = vsel %vm180, %v181, %v179
    %v183 = vrsqrt.pop %v133
    %v184 = vmul.f32 %v133, %v183
    %vm185 = vcmp.eq.f32.partialorder %v133, inf
    %v186 = vsel %vm185, %v133, %v184
    %vm187 = vcmp.eq.f32.partialorder %v133, 0.0
    %v188 = vand.u32 %v133, 2147483648
    %v189 = vsel %vm187, %v188, %v186
    %v190 = vsub.f32 %v140, 1.0
    %v191 = vsub.f32 %v147, 1.0
    %v192 = vsub.f32 %v154, 1.0
    %v193 = vsub.f32 %v161, 1.0
    %v194 = vsub.f32 %v168, 1.0
    %v195 = vsub.f32 %v175, 1.0
    %v196 = vsub.f32 %v182, 1.0
    %v197 = vsub.f32 %v189, 1.0
    %v198 = vstv %s91
    %v199 = vadd.s32 %v198, %v93
    %vm200 = vcmp.lt.s32.totalorder %v199, 2
    %v201 = vsel %vm200, 1, 0
    %vm202 = vcmp.eq.s32.totalorder %v201, 1
    %v211 = vcombine.low %v190, %v192
    %v212 = vcombine.high %v190, %v192
    %v213 = vcombine.low %v194, %v196
    %v214 = vcombine.high %v194, %v196
    %v216 = vunpack.c.l.s4 1983009808
    %v217 = vunpack.c.0.s8 %v216
    %v218 = vlaneseq
    %v219 = vshrl.u32 %v218, 7
    %v220 = vsub.s32 %v217, %v219
    %v221 = vrot.slane %v211, %v220
    %v223 = vunpack.c.l.s4 1983009808
    %v224 = vunpack.c.0.s8 %v223
    %v225 = vlaneseq
    %v226 = vshrl.u32 %v225, 7
    %v227 = vsub.s32 %v224, %v226
    %v228 = vrot.slane %v212, %v227
    %v230 = vunpack.c.l.s4 1983009808
    %v231 = vunpack.c.0.s8 %v230
    %v232 = vlaneseq
    %v233 = vshrl.u32 %v232, 7
    %v234 = vsub.s32 %v231, %v233
    %v235 = vrot.slane %v213, %v234
    %v237 = vunpack.c.l.s4 1983009808
    %v238 = vunpack.c.0.s8 %v237
    %v239 = vlaneseq
    %v240 = vshrl.u32 %v239, 7
    %v241 = vsub.s32 %v238, %v240
    %v242 = vrot.slane %v214, %v241
    %v243 = vcombine.low %v221, %v235
    %v244 = vcombine.high %v221, %v235
    %v245 = vcombine.low %v228, %v242
    %v246 = vcombine.high %v228, %v242
    %v247 = vcombine.low %v191, %v193
    %v248 = vcombine.high %v191, %v193
    %v249 = vcombine.low %v195, %v197
    %v250 = vcombine.high %v195, %v197
    %v252 = vunpack.c.l.s4 1983009808
    %v253 = vunpack.c.0.s8 %v252
    %v254 = vlaneseq
    %v255 = vshrl.u32 %v254, 7
    %v256 = vsub.s32 %v253, %v255
    %v257 = vrot.slane %v247, %v256
    %v259 = vunpack.c.l.s4 1983009808
    %v260 = vunpack.c.0.s8 %v259
    %v261 = vlaneseq
    %v262 = vshrl.u32 %v261, 7
    %v263 = vsub.s32 %v260, %v262
    %v264 = vrot.slane %v248, %v263
    %v266 = vunpack.c.l.s4 1983009808
    %v267 = vunpack.c.0.s8 %v266
    %v268 = vlaneseq
    %v269 = vshrl.u32 %v268, 7
    %v270 = vsub.s32 %v267, %v269
    %v271 = vrot.slane %v249, %v270
    %v273 = vunpack.c.l.s4 1983009808
    %v274 = vunpack.c.0.s8 %v273
    %v275 = vlaneseq
    %v276 = vshrl.u32 %v275, 7
    %v277 = vsub.s32 %v274, %v276
    %v278 = vrot.slane %v250, %v277
    %v279 = vcombine.low %v257, %v271
    %v280 = vcombine.high %v257, %v271
    %v281 = vcombine.low %v264, %v278
    %v282 = vcombine.high %v264, %v278
    %v291 = vsel %vm202, %v243, 0.0
    %v292 = vsel %vm202, %v244, 0.0
    %v293 = vsel %vm202, %v245, 0.0
    %v294 = vsel %vm202, %v246, 0.0
    %v295 = vsel %vm202, %v279, 0.0
    %v296 = vsel %vm202, %v280, 0.0
    %v297 = vsel %vm202, %v281, 0.0
    %v298 = vsel %vm202, %v282, 0.0
    %v299 = vadd.f32 %v291, 0.0
    %v300 = vadd.f32 %v292, 0.0
    %v301 = vadd.f32 %v293, 0.0
    %v302 = vadd.f32 %v294, 0.0
    %v303 = vadd.f32 %v295, 0.0
    %v304 = vadd.f32 %v296, 0.0
    %v305 = vadd.f32 %v297, 0.0
    %v306 = vadd.f32 %v298, 0.0
    %v307 = vld [vmem:[#allocation2 + $0x40] sm:$0xff]
    %v308 = vld [vmem:[#allocation2 + $0x48] sm:$0xff]
    %v309 = vld [vmem:[#allocation2 + $0x50] sm:$0xff]
    %v310 = vld [vmem:[#allocation2 + $0x58] sm:$0xff]
    %v311 = vld [vmem:[#allocation2 + $0x60] sm:$0xff]
    %v312 = vld [vmem:[#allocation2 + $0x68] sm:$0xff]
    %v313 = vld [vmem:[#allocation2 + $0x70] sm:$0xff]
    %v314 = vld [vmem:[#allocation2 + $0x78] sm:$0xff]
    %v315 = vld [vmem:[#allocation5 + $0x40] sm:$0xff]
    %v316 = vld [vmem:[#allocation5 + $0x48] sm:$0xff]
    %v317 = vld [vmem:[#allocation5 + $0x50] sm:$0xff]
    %v318 = vld [vmem:[#allocation5 + $0x58] sm:$0xff]
    %v319 = vld [vmem:[#allocation5 + $0x60] sm:$0xff]
    %v320 = vld [vmem:[#allocation5 + $0x68] sm:$0xff]
    %v321 = vld [vmem:[#allocation5 + $0x70] sm:$0xff]
    %v322 = vld [vmem:[#allocation5 + $0x78] sm:$0xff]
    %v323 = vsub.f32 %v315, %v307
    %v324 = vsub.f32 %v316, %v308
    %v325 = vsub.f32 %v317, %v309
    %v326 = vsub.f32 %v318, %v310
    %v327 = vsub.f32 %v319, %v311
    %v328 = vsub.f32 %v320, %v312
    %v329 = vsub.f32 %v321, %v313
    %v330 = vsub.f32 %v322, %v314
    %v331 = vmul.f32 %v323, %v323
    %v332 = vmul.f32 %v324, %v324
    %v333 = vmul.f32 %v325, %v325
    %v334 = vmul.f32 %v326, %v326
    %v335 = vmul.f32 %v327, %v327
    %v336 = vmul.f32 %v328, %v328
    %v337 = vmul.f32 %v329, %v329
    %v338 = vmul.f32 %v330, %v330
    %v339 = vadd.f32 %v331, 1.0
    %v340 = vadd.f32 %v332, 1.0
    %v341 = vadd.f32 %v333, 1.0
    %v342 = vadd.f32 %v334, 1.0
    %v343 = vadd.f32 %v335, 1.0
    %v344 = vadd.f32 %v336, 1.0
    %v345 = vadd.f32 %v337, 1.0
    %v346 = vadd.f32 %v338, 1.0
    %v347 = vrsqrt.pop %v339
    %v348 = vmul.f32 %v339, %v347
    %vm349 = vcmp.eq.f32.partialorder %v339, inf
    %v350 = vsel %vm349, %v339, %v348
    %vm351 = vcmp.eq.f32.partialorder %v339, 0.0
    %v352 = vand.u32 %v339, 2147483648
    %v353 = vsel %vm351, %v352, %v350
    %v354 = vrsqrt.pop %v340
    %v355 = vmul.f32 %v340, %v354
    %vm356 = vcmp.eq.f32.partialorder %v340, inf
    %v357 = vsel %vm356, %v340, %v355
    %vm358 = vcmp.eq.f32.partialorder %v340, 0.0
    %v359 = vand.u32 %v340, 2147483648
    %v360 = vsel %vm358, %v359, %v357
    %v361 = vrsqrt.pop %v341
    %v362 = vmul.f32 %v341, %v361
    %vm363 = vcmp.eq.f32.partialorder %v341, inf
    %v364 = vsel %vm363, %v341, %v362
    %vm365 = vcmp.eq.f32.partialorder %v341, 0.0
    %v366 = vand.u32 %v341, 2147483648
    %v367 = vsel %vm365, %v366, %v364
    %v368 = vrsqrt.pop %v342
    %v369 = vmul.f32 %v342, %v368
    %vm370 = vcmp.eq.f32.partialorder %v342, inf
    %v371 = vsel %vm370, %v342, %v369
    %vm372 = vcmp.eq.f32.partialorder %v342, 0.0
    %v373 = vand.u32 %v342, 2147483648
    %v374 = vsel %vm372, %v373, %v371
    %v375 = vrsqrt.pop %v343
    %v376 = vmul.f32 %v343, %v375
    %vm377 = vcmp.eq.f32.partialorder %v343, inf
    %v378 = vsel %vm377, %v343, %v376
    %vm379 = vcmp.eq.f32.partialorder %v343, 0.0
    %v380 = vand.u32 %v343, 2147483648
    %v381 = vsel %vm379, %v380, %v378
    %v382 = vrsqrt.pop %v344
    %v383 = vmul.f32 %v344, %v382
    %vm384 = vcmp.eq.f32.partialorder %v344, inf
    %v385 = vsel %vm384, %v344, %v383
    %vm386 = vcmp.eq.f32.partialorder %v344, 0.0
    %v387 = vand.u32 %v344, 2147483648
    %v388 = vsel %vm386, %v387, %v385
    %v389 = vrsqrt.pop %v345
    %v390 = vmul.f32 %v345, %v389
    %vm391 = vcmp.eq.f32.partialorder %v345, inf
    %v392 = vsel %vm391, %v345, %v390
    %vm393 = vcmp.eq.f32.partialorder %v345, 0.0
    %v394 = vand.u32 %v345, 2147483648
    %v395 = vsel %vm393, %v394, %v392
    %v396 = vrsqrt.pop %v346
    %v397 = vmul.f32 %v346, %v396
    %vm398 = vcmp.eq.f32.partialorder %v346, inf
    %v399 = vsel %vm398, %v346, %v397
    %vm400 = vcmp.eq.f32.partialorder %v346, 0.0
    %v401 = vand.u32 %v346, 2147483648
    %v402 = vsel %vm400, %v401, %v399
    %v403 = vsub.f32 %v353, 1.0
    %v404 = vsub.f32 %v360, 1.0
    %v405 = vsub.f32 %v367, 1.0
    %v406 = vsub.f32 %v374, 1.0
    %v407 = vsub.f32 %v381, 1.0
    %v408 = vsub.f32 %v388, 1.0
    %v409 = vsub.f32 %v395, 1.0
    %v410 = vsub.f32 %v402, 1.0
    %s411 = sadd.s32 %s91, 8
    %v412 = vstv %s411
    %v413 = vadd.s32 %v412, %v93
    %vm414 = vcmp.lt.s32.totalorder %v413, 2
    %v415 = vsel %vm414, 1, 0
    %vm416 = vcmp.eq.s32.totalorder %v415, 1
    %v425 = vcombine.low %v403, %v405
    %v426 = vcombine.high %v403, %v405
    %v427 = vcombine.low %v407, %v409
    %v428 = vcombine.high %v407, %v409
    %v430 = vunpack.c.l.s4 1983009808
    %v431 = vunpack.c.0.s8 %v430
    %v432 = vlaneseq
    %v433 = vshrl.u32 %v432, 7
    %v434 = vsub.s32 %v431, %v433
    %v435 = vrot.slane %v425, %v434
    %v437 = vunpack.c.l.s4 1983009808
    %v438 = vunpack.c.0.s8 %v437
    %v439 = vlaneseq
    %v440 = vshrl.u32 %v439, 7
    %v441 = vsub.s32 %v438, %v440
    %v442 = vrot.slane %v426, %v441
    %v444 = vunpack.c.l.s4 1983009808
    %v445 = vunpack.c.0.s8 %v444
    %v446 = vlaneseq
    %v447 = vshrl.u32 %v446, 7
    %v448 = vsub.s32 %v445, %v447
    %v449 = vrot.slane %v427, %v448
    %v451 = vunpack.c.l.s4 1983009808
    %v452 = vunpack.c.0.s8 %v451
    %v453 = vlaneseq
    %v454 = vshrl.u32 %v453, 7
    %v455 = vsub.s32 %v452, %v454
    %v456 = vrot.slane %v428, %v455
    %v457 = vcombine.low %v435, %v449
    %v458 = vcombine.high %v435, %v449
    %v459 = vcombine.low %v442, %v456
    %v460 = vcombine.high %v442, %v456
    %v461 = vcombine.low %v404, %v406
    %v462 = vcombine.high %v404, %v406
    %v463 = vcombine.low %v408, %v410
    %v464 = vcombine.high %v408, %v410
    %v466 = vunpack.c.l.s4 1983009808
    %v467 = vunpack.c.0.s8 %v466
    %v468 = vlaneseq
    %v469 = vshrl.u32 %v468, 7
    %v470 = vsub.s32 %v467, %v469
    %v471 = vrot.slane %v461, %v470
    %v473 = vunpack.c.l.s4 1983009808
    %v474 = vunpack.c.0.s8 %v473
    %v475 = vlaneseq
    %v476 = vshrl.u32 %v475, 7
    %v477 = vsub.s32 %v474, %v476
    %v478 = vrot.slane %v462, %v477
    %v480 = vunpack.c.l.s4 1983009808
    %v481 = vunpack.c.0.s8 %v480
    %v482 = vlaneseq
    %v483 = vshrl.u32 %v482, 7
    %v484 = vsub.s32 %v481, %v483
    %v485 = vrot.slane %v463, %v484
    %v487 = vunpack.c.l.s4 1983009808
    %v488 = vunpack.c.0.s8 %v487
    %v489 = vlaneseq
    %v490 = vshrl.u32 %v489, 7
    %v491 = vsub.s32 %v488, %v490
    %v492 = vrot.slane %v464, %v491
    %v493 = vcombine.low %v471, %v485
    %v494 = vcombine.high %v471, %v485
    %v495 = vcombine.low %v478, %v492
    %v496 = vcombine.high %v478, %v492
    %v505 = vsel %vm416, %v457, 0.0
    %v506 = vsel %vm416, %v458, 0.0
    %v507 = vsel %vm416, %v459, 0.0
    %v508 = vsel %vm416, %v460, 0.0
    %v509 = vsel %vm416, %v493, 0.0
    %v510 = vsel %vm416, %v494, 0.0
    %v511 = vsel %vm416, %v495, 0.0
    %v512 = vsel %vm416, %v496, 0.0
    %v513 = vadd.f32 %v299, %v505
    %v514 = vadd.f32 %v300, %v506
    %v515 = vadd.f32 %v301, %v507
    %v516 = vadd.f32 %v302, %v508
    %v517 = vadd.f32 %v303, %v509
    %v518 = vadd.f32 %v304, %v510
    %v519 = vadd.f32 %v305, %v511
    %v520 = vadd.f32 %v306, %v512
    %v521 = vld [vmem:[#allocation2 + $0x80] sm:$0xff]
    %v522 = vld [vmem:[#allocation2 + $0x88] sm:$0xff]
    %v523 = vld [vmem:[#allocation2 + $0x90] sm:$0xff]
    %v524 = vld [vmem:[#allocation2 + $0x98] sm:$0xff]
    %v525 = vld [vmem:[#allocation2 + $0xa0] sm:$0xff]
    %v526 = vld [vmem:[#allocation2 + $0xa8] sm:$0xff]
    %v527 = vld [vmem:[#allocation2 + $0xb0] sm:$0xff]
    %v528 = vld [vmem:[#allocation2 + $0xb8] sm:$0xff]
    %v529 = vld [vmem:[#allocation5 + $0x80] sm:$0xff]
    %v530 = vld [vmem:[#allocation5 + $0x88] sm:$0xff]
    %v531 = vld [vmem:[#allocation5 + $0x90] sm:$0xff]
    %v532 = vld [vmem:[#allocation5 + $0x98] sm:$0xff]
    %v533 = vld [vmem:[#allocation5 + $0xa0] sm:$0xff]
    %v534 = vld [vmem:[#allocation5 + $0xa8] sm:$0xff]
    %v535 = vld [vmem:[#allocation5 + $0xb0] sm:$0xff]
    %v536 = vld [vmem:[#allocation5 + $0xb8] sm:$0xff]
    %v537 = vsub.f32 %v529, %v521
    %v538 = vsub.f32 %v530, %v522
    %v539 = vsub.f32 %v531, %v523
    %v540 = vsub.f32 %v532, %v524
    %v541 = vsub.f32 %v533, %v525
    %v542 = vsub.f32 %v534, %v526
    %v543 = vsub.f32 %v535, %v527
    %v544 = vsub.f32 %v536, %v528
    %v545 = vmul.f32 %v537, %v537
    %v546 = vmul.f32 %v538, %v538
    %v547 = vmul.f32 %v539, %v539
    %v548 = vmul.f32 %v540, %v540
    %v549 = vmul.f32 %v541, %v541
    %v550 = vmul.f32 %v542, %v542
    %v551 = vmul.f32 %v543, %v543
    %v552 = vmul.f32 %v544, %v544
    %v553 = vadd.f32 %v545, 1.0
    %v554 = vadd.f32 %v546, 1.0
    %v555 = vadd.f32 %v547, 1.0
    %v556 = vadd.f32 %v548, 1.0
    %v557 = vadd.f32 %v549, 1.0
    %v558 = vadd.f32 %v550, 1.0
    %v559 = vadd.f32 %v551, 1.0
    %v560 = vadd.f32 %v552, 1.0
    %v561 = vrsqrt.pop %v553
    %v562 = vmul.f32 %v553, %v561
    %vm563 = vcmp.eq.f32.partialorder %v553, inf
    %v564 = vsel %vm563, %v553, %v562
    %vm565 = vcmp.eq.f32.partialorder %v553, 0.0
    %v566 = vand.u32 %v553, 2147483648
    %v567 = vsel %vm565, %v566, %v564
    %v568 = vrsqrt.pop %v554
    %v569 = vmul.f32 %v554, %v568
    %vm570 = vcmp.eq.f32.partialorder %v554, inf
    %v571 = vsel %vm570, %v554, %v569
    %vm572 = vcmp.eq.f32.partialorder %v554, 0.0
    %v573 = vand.u32 %v554, 2147483648
    %v574 = vsel %vm572, %v573, %v571
    %v575 = vrsqrt.pop %v555
    %v576 = vmul.f32 %v555, %v575
    %vm577 = vcmp.eq.f32.partialorder %v555, inf
    %v578 = vsel %vm577, %v555, %v576
    %vm579 = vcmp.eq.f32.partialorder %v555, 0.0
    %v580 = vand.u32 %v555, 2147483648
    %v581 = vsel %vm579, %v580, %v578
    %v582 = vrsqrt.pop %v556
    %v583 = vmul.f32 %v556, %v582
    %vm584 = vcmp.eq.f32.partialorder %v556, inf
    %v585 = vsel %vm584, %v556, %v583
    %vm586 = vcmp.eq.f32.partialorder %v556, 0.0
    %v587 = vand.u32 %v556, 2147483648
    %v588 = vsel %vm586, %v587, %v585
    %v589 = vrsqrt.pop %v557
    %v590 = vmul.f32 %v557, %v589
    %vm591 = vcmp.eq.f32.partialorder %v557, inf
    %v592 = vsel %vm591, %v557, %v590
    %vm593 = vcmp.eq.f32.partialorder %v557, 0.0
    %v594 = vand.u32 %v557, 2147483648
    %v595 = vsel %vm593, %v594, %v592
    %v596 = vrsqrt.pop %v558
    %v597 = vmul.f32 %v558, %v596
    %vm598 = vcmp.eq.f32.partialorder %v558, inf
    %v599 = vsel %vm598, %v558, %v597
    %vm600 = vcmp.eq.f32.partialorder %v558, 0.0
    %v601 = vand.u32 %v558, 2147483648
    %v602 = vsel %vm600, %v601, %v599
    %v603 = vrsqrt.pop %v559
    %v604 = vmul.f32 %v559, %v603
    %vm605 = vcmp.eq.f32.partialorder %v559, inf
    %v606 = vsel %vm605, %v559, %v604
    %vm607 = vcmp.eq.f32.partialorder %v559, 0.0
    %v608 = vand.u32 %v559, 2147483648
    %v609 = vsel %vm607, %v608, %v606
    %v610 = vrsqrt.pop %v560
    %v611 = vmul.f32 %v560, %v610
    %vm612 = vcmp.eq.f32.partialorder %v560, inf
    %v613 = vsel %vm612, %v560, %v611
    %vm614 = vcmp.eq.f32.partialorder %v560, 0.0
    %v615 = vand.u32 %v560, 2147483648
    %v616 = vsel %vm614, %v615, %v613
    %v617 = vsub.f32 %v567, 1.0
    %v618 = vsub.f32 %v574, 1.0
    %v619 = vsub.f32 %v581, 1.0
    %v620 = vsub.f32 %v588, 1.0
    %v621 = vsub.f32 %v595, 1.0
    %v622 = vsub.f32 %v602, 1.0
    %v623 = vsub.f32 %v609, 1.0
    %v624 = vsub.f32 %v616, 1.0
    %s625 = sadd.s32 %s91, 16
    %v626 = vstv %s625
    %v627 = vadd.s32 %v626, %v93
    %vm628 = vcmp.lt.s32.totalorder %v627, 2
    %v629 = vsel %vm628, 1, 0
    %vm630 = vcmp.eq.s32.totalorder %v629, 1
    %v639 = vcombine.low %v617, %v619
    %v640 = vcombine.high %v617, %v619
    %v641 = vcombine.low %v621, %v623
    %v642 = vcombine.high %v621, %v623
    %v644 = vunpack.c.l.s4 1983009808
    %v645 = vunpack.c.0.s8 %v644
    %v646 = vlaneseq
    %v647 = vshrl.u32 %v646, 7
    %v648 = vsub.s32 %v645, %v647
    %v649 = vrot.slane %v639, %v648
    %v651 = vunpack.c.l.s4 1983009808
    %v652 = vunpack.c.0.s8 %v651
    %v653 = vlaneseq
    %v654 = vshrl.u32 %v653, 7
    %v655 = vsub.s32 %v652, %v654
    %v656 = vrot.slane %v640, %v655
    %v658 = vunpack.c.l.s4 1983009808
    %v659 = vunpack.c.0.s8 %v658
    %v660 = vlaneseq
    %v661 = vshrl.u32 %v660, 7
    %v662 = vsub.s32 %v659, %v661
    %v663 = vrot.slane %v641, %v662
    %v665 = vunpack.c.l.s4 1983009808
    %v666 = vunpack.c.0.s8 %v665
    %v667 = vlaneseq
    %v668 = vshrl.u32 %v667, 7
    %v669 = vsub.s32 %v666, %v668
    %v670 = vrot.slane %v642, %v669
    %v671 = vcombine.low %v649, %v663
    %v672 = vcombine.high %v649, %v663
    %v673 = vcombine.low %v656, %v670
    %v674 = vcombine.high %v656, %v670
    %v675 = vcombine.low %v618, %v620
    %v676 = vcombine.high %v618, %v620
    %v677 = vcombine.low %v622, %v624
    %v678 = vcombine.high %v622, %v624
    %v680 = vunpack.c.l.s4 1983009808
    %v681 = vunpack.c.0.s8 %v680
    %v682 = vlaneseq
    %v683 = vshrl.u32 %v682, 7
    %v684 = vsub.s32 %v681, %v683
    %v685 = vrot.slane %v675, %v684
    %v687 = vunpack.c.l.s4 1983009808
    %v688 = vunpack.c.0.s8 %v687
    %v689 = vlaneseq
    %v690 = vshrl.u32 %v689, 7
    %v691 = vsub.s32 %v688, %v690
    %v692 = vrot.slane %v676, %v691
    %v694 = vunpack.c.l.s4 1983009808
    %v695 = vunpack.c.0.s8 %v694
    %v696 = vlaneseq
    %v697 = vshrl.u32 %v696, 7
    %v698 = vsub.s32 %v695, %v697
    %v699 = vrot.slane %v677, %v698
    %v701 = vunpack.c.l.s4 1983009808
    %v702 = vunpack.c.0.s8 %v701
    %v703 = vlaneseq
    %v704 = vshrl.u32 %v703, 7
    %v705 = vsub.s32 %v702, %v704
    %v706 = vrot.slane %v678, %v705
    %v707 = vcombine.low %v685, %v699
    %v708 = vcombine.high %v685, %v699
    %v709 = vcombine.low %v692, %v706
    %v710 = vcombine.high %v692, %v706
    %v719 = vsel %vm630, %v671, 0.0
    %v720 = vsel %vm630, %v672, 0.0
    %v721 = vsel %vm630, %v673, 0.0
    %v722 = vsel %vm630, %v674, 0.0
    %v723 = vsel %vm630, %v707, 0.0
    %v724 = vsel %vm630, %v708, 0.0
    %v725 = vsel %vm630, %v709, 0.0
    %v726 = vsel %vm630, %v710, 0.0
    %v727 = vadd.f32 %v513, %v719
    %v728 = vadd.f32 %v514, %v720
    %v729 = vadd.f32 %v515, %v721
    %v730 = vadd.f32 %v516, %v722
    %v731 = vadd.f32 %v517, %v723
    %v732 = vadd.f32 %v518, %v724
    %v733 = vadd.f32 %v519, %v725
    %v734 = vadd.f32 %v520, %v726
    %v735 = vld [vmem:[#allocation2 + $0xc0] sm:$0xff]
    %v736 = vld [vmem:[#allocation2 + $0xc8] sm:$0xff]
    %v737 = vld [vmem:[#allocation2 + $0xd0] sm:$0xff]
    %v738 = vld [vmem:[#allocation2 + $0xd8] sm:$0xff]
    %v739 = vld [vmem:[#allocation2 + $0xe0] sm:$0xff]
    %v740 = vld [vmem:[#allocation2 + $0xe8] sm:$0xff]
    %v741 = vld [vmem:[#allocation2 + $0xf0] sm:$0xff]
    %v742 = vld [vmem:[#allocation2 + $0xf8] sm:$0xff]
    %v743 = vld [vmem:[#allocation5 + $0xc0] sm:$0xff]
    %v744 = vld [vmem:[#allocation5 + $0xc8] sm:$0xff]
    %v745 = vld [vmem:[#allocation5 + $0xd0] sm:$0xff]
    %v746 = vld [vmem:[#allocation5 + $0xd8] sm:$0xff]
    %v747 = vld [vmem:[#allocation5 + $0xe0] sm:$0xff]
    %v748 = vld [vmem:[#allocation5 + $0xe8] sm:$0xff]
    %v749 = vld [vmem:[#allocation5 + $0xf0] sm:$0xff]
    %v750 = vld [vmem:[#allocation5 + $0xf8] sm:$0xff]
    %v751 = vsub.f32 %v743, %v735
    %v752 = vsub.f32 %v744, %v736
    %v753 = vsub.f32 %v745, %v737
    %v754 = vsub.f32 %v746, %v738
    %v755 = vsub.f32 %v747, %v739
    %v756 = vsub.f32 %v748, %v740
    %v757 = vsub.f32 %v749, %v741
    %v758 = vsub.f32 %v750, %v742
    %v759 = vmul.f32 %v751, %v751
    %v760 = vmul.f32 %v752, %v752
    %v761 = vmul.f32 %v753, %v753
    %v762 = vmul.f32 %v754, %v754
    %v763 = vmul.f32 %v755, %v755
    %v764 = vmul.f32 %v756, %v756
    %v765 = vmul.f32 %v757, %v757
    %v766 = vmul.f32 %v758, %v758
    %v767 = vadd.f32 %v759, 1.0
    %v768 = vadd.f32 %v760, 1.0
    %v769 = vadd.f32 %v761, 1.0
    %v770 = vadd.f32 %v762, 1.0
    %v771 = vadd.f32 %v763, 1.0
    %v772 = vadd.f32 %v764, 1.0
    %v773 = vadd.f32 %v765, 1.0
    %v774 = vadd.f32 %v766, 1.0
    %v775 = vrsqrt.pop %v767
    %v776 = vmul.f32 %v767, %v775
    %vm777 = vcmp.eq.f32.partialorder %v767, inf
    %v778 = vsel %vm777, %v767, %v776
    %vm779 = vcmp.eq.f32.partialorder %v767, 0.0
    %v780 = vand.u32 %v767, 2147483648
    %v781 = vsel %vm779, %v780, %v778
    %v782 = vrsqrt.pop %v768
    %v783 = vmul.f32 %v768, %v782
    %vm784 = vcmp.eq.f32.partialorder %v768, inf
    %v785 = vsel %vm784, %v768, %v783
    %vm786 = vcmp.eq.f32.partialorder %v768, 0.0
    %v787 = vand.u32 %v768, 2147483648
    %v788 = vsel %vm786, %v787, %v785
    %v789 = vrsqrt.pop %v769
    %v790 = vmul.f32 %v769, %v789
    %vm791 = vcmp.eq.f32.partialorder %v769, inf
    %v792 = vsel %vm791, %v769, %v790
    %vm793 = vcmp.eq.f32.partialorder %v769, 0.0
    %v794 = vand.u32 %v769, 2147483648
    %v795 = vsel %vm793, %v794, %v792
    %v796 = vrsqrt.pop %v770
    %v797 = vmul.f32 %v770, %v796
    %vm798 = vcmp.eq.f32.partialorder %v770, inf
    %v799 = vsel %vm798, %v770, %v797
    %vm800 = vcmp.eq.f32.partialorder %v770, 0.0
    %v801 = vand.u32 %v770, 2147483648
    %v802 = vsel %vm800, %v801, %v799
    %v803 = vrsqrt.pop %v771
    %v804 = vmul.f32 %v771, %v803
    %vm805 = vcmp.eq.f32.partialorder %v771, inf
    %v806 = vsel %vm805, %v771, %v804
    %vm807 = vcmp.eq.f32.partialorder %v771, 0.0
    %v808 = vand.u32 %v771, 2147483648
    %v809 = vsel %vm807, %v808, %v806
    %v810 = vrsqrt.pop %v772
    %v811 = vmul.f32 %v772, %v810
    %vm812 = vcmp.eq.f32.partialorder %v772, inf
    %v813 = vsel %vm812, %v772, %v811
    %vm814 = vcmp.eq.f32.partialorder %v772, 0.0
    %v815 = vand.u32 %v772, 2147483648
    %v816 = vsel %vm814, %v815, %v813
    %v817 = vrsqrt.pop %v773
    %v818 = vmul.f32 %v773, %v817
    %vm819 = vcmp.eq.f32.partialorder %v773, inf
    %v820 = vsel %vm819, %v773, %v818
    %vm821 = vcmp.eq.f32.partialorder %v773, 0.0
    %v822 = vand.u32 %v773, 2147483648
    %v823 = vsel %vm821, %v822, %v820
    %v824 = vrsqrt.pop %v774
    %v825 = vmul.f32 %v774, %v824
    %vm826 = vcmp.eq.f32.partialorder %v774, inf
    %v827 = vsel %vm826, %v774, %v825
    %vm828 = vcmp.eq.f32.partialorder %v774, 0.0
    %v829 = vand.u32 %v774, 2147483648
    %v830 = vsel %vm828, %v829, %v827
    %v831 = vsub.f32 %v781, 1.0
    %v832 = vsub.f32 %v788, 1.0
    %v833 = vsub.f32 %v795, 1.0
    %v834 = vsub.f32 %v802, 1.0
    %v835 = vsub.f32 %v809, 1.0
    %v836 = vsub.f32 %v816, 1.0
    %v837 = vsub.f32 %v823, 1.0
    %v838 = vsub.f32 %v830, 1.0
    %s839 = sadd.s32 %s91, 24
    %v840 = vstv %s839
    %v841 = vadd.s32 %v840, %v93
    %vm842 = vcmp.lt.s32.totalorder %v841, 2
    %v843 = vsel %vm842, 1, 0
    %vm844 = vcmp.eq.s32.totalorder %v843, 1
    %v853 = vcombine.low %v831, %v833
    %v854 = vcombine.high %v831, %v833
    %v855 = vcombine.low %v835, %v837
    %v856 = vcombine.high %v835, %v837
    %v858 = vunpack.c.l.s4 1983009808
    %v859 = vunpack.c.0.s8 %v858
    %v860 = vlaneseq
    %v861 = vshrl.u32 %v860, 7
    %v862 = vsub.s32 %v859, %v861
    %v863 = vrot.slane %v853, %v862
    %v865 = vunpack.c.l.s4 1983009808
    %v866 = vunpack.c.0.s8 %v865
    %v867 = vlaneseq
    %v868 = vshrl.u32 %v867, 7
    %v869 = vsub.s32 %v866, %v868
    %v870 = vrot.slane %v854, %v869
    %v872 = vunpack.c.l.s4 1983009808
    %v873 = vunpack.c.0.s8 %v872
    %v874 = vlaneseq
    %v875 = vshrl.u32 %v874, 7
    %v876 = vsub.s32 %v873, %v875
    %v877 = vrot.slane %v855, %v876
    %v879 = vunpack.c.l.s4 1983009808
    %v880 = vunpack.c.0.s8 %v879
    %v881 = vlaneseq
    %v882 = vshrl.u32 %v881, 7
    %v883 = vsub.s32 %v880, %v882
    %v884 = vrot.slane %v856, %v883
    %v885 = vcombine.low %v863, %v877
    %v886 = vcombine.high %v863, %v877
    %v887 = vcombine.low %v870, %v884
    %v888 = vcombine.high %v870, %v884
    %v889 = vcombine.low %v832, %v834
    %v890 = vcombine.high %v832, %v834
    %v891 = vcombine.low %v836, %v838
    %v892 = vcombine.high %v836, %v838
    %v894 = vunpack.c.l.s4 1983009808
    %v895 = vunpack.c.0.s8 %v894
    %v896 = vlaneseq
    %v897 = vshrl.u32 %v896, 7
    %v898 = vsub.s32 %v895, %v897
    %v899 = vrot.slane %v889, %v898
    %v901 = vunpack.c.l.s4 1983009808
    %v902 = vunpack.c.0.s8 %v901
    %v903 = vlaneseq
    %v904 = vshrl.u32 %v903, 7
    %v905 = vsub.s32 %v902, %v904
    %v906 = vrot.slane %v890, %v905
    %v908 = vunpack.c.l.s4 1983009808
    %v909 = vunpack.c.0.s8 %v908
    %v910 = vlaneseq
    %v911 = vshrl.u32 %v910, 7
    %v912 = vsub.s32 %v909, %v911
    %v913 = vrot.slane %v891, %v912
    %v915 = vunpack.c.l.s4 1983009808
    %v916 = vunpack.c.0.s8 %v915
    %v917 = vlaneseq
    %v918 = vshrl.u32 %v917, 7
    %v919 = vsub.s32 %v916, %v918
    %v920 = vrot.slane %v892, %v919
    %v921 = vcombine.low %v899, %v913
    %v922 = vcombine.high %v899, %v913
    %v923 = vcombine.low %v906, %v920
    %v924 = vcombine.high %v906, %v920
    %v933 = vsel %vm844, %v885, 0.0
    %v934 = vsel %vm844, %v886, 0.0
    %v935 = vsel %vm844, %v887, 0.0
    %v936 = vsel %vm844, %v888, 0.0
    %v937 = vsel %vm844, %v921, 0.0
    %v938 = vsel %vm844, %v922, 0.0
    %v939 = vsel %vm844, %v923, 0.0
    %v940 = vsel %vm844, %v924, 0.0
    %v941 = vadd.f32 %v727, %v933
    %v942 = vadd.f32 %v728, %v934
    %v943 = vadd.f32 %v729, %v935
    %v944 = vadd.f32 %v730, %v936
    %v945 = vadd.f32 %v731, %v937
    %v946 = vadd.f32 %v732, %v938
    %v947 = vadd.f32 %v733, %v939
    %v948 = vadd.f32 %v734, %v940
    %v949 = vld [vmem:[#allocation7] sm:$0xff]
    %v950 = vld [vmem:[#allocation7 + $0x8] sm:$0xff]
    %v951 = vld [vmem:[#allocation7 + $0x10] sm:$0xff]
    %v952 = vld [vmem:[#allocation7 + $0x18] sm:$0xff]
    %v953 = vld [vmem:[#allocation7 + $0x20] sm:$0xff]
    %v954 = vld [vmem:[#allocation7 + $0x28] sm:$0xff]
    %v955 = vld [vmem:[#allocation7 + $0x30] sm:$0xff]
    %v956 = vld [vmem:[#allocation7 + $0x38] sm:$0xff]
    %v957 = vadd.f32 %v949, %v941
    %v958 = vadd.f32 %v950, %v942
    %v959 = vadd.f32 %v951, %v943
    %v960 = vadd.f32 %v952, %v944
    %v961 = vadd.f32 %v953, %v945
    %v962 = vadd.f32 %v954, %v946
    %v963 = vadd.f32 %v955, %v947
    %v964 = vadd.f32 %v956, %v948
    %965 = vst [vmem:[#allocation7] sm:$0xff] %v957
    %966 = vst [vmem:[#allocation7 + $0x8] sm:$0xff] %v958
    %967 = vst [vmem:[#allocation7 + $0x10] sm:$0xff] %v959
    %968 = vst [vmem:[#allocation7 + $0x18] sm:$0xff] %v960
    %969 = vst [vmem:[#allocation7 + $0x20] sm:$0xff] %v961
    %970 = vst [vmem:[#allocation7 + $0x28] sm:$0xff] %v962
    %971 = vst [vmem:[#allocation7 + $0x30] sm:$0xff] %v963
    %972 = vst [vmem:[#allocation7 + $0x38] sm:$0xff] %v964
    // Predicated region
    $region22: #{tpu_custom_call.1} parent=1 // pred_check
      _
    $region23: #{tpu_custom_call.1} parent=1 // pred_check_branch
      %974 = sbr.rel (0) target = $region25
    $region24: #{tpu_custom_call.1} parent=1 // pred_region
      %s976 = ssub.s32 1024, 1024
      %977 = vsyncadd [#allocation4], %s976
      %s979 = sshll.u32 [#allocation7], 4
      %s980 = int_to_ptr.vmem [resolvable:$true] %s979
      %982 = dma.vmem_to_hbm [thread:$0]  %s980, 1024, %s2, [#allocation4]
    $region25: #{tpu_custom_call.1} parent=1 // pred_fallthru
      _
    // Predicated region
    $region26: #{tpu_custom_call.1} parent=1 // pred_check
      _
    $region27: #{tpu_custom_call.1} parent=1 // pred_check_branch
      %984 = sbr.rel (0) target = $region29
    $region28: #{tpu_custom_call.1} parent=1 // pred_region
      %985 = dma.done [#allocation4], 1024
    $region29: #{tpu_custom_call.1} parent=1 // pred_fallthru
      _
    %986 = vsyncpa [#allocation3], 1
    %987 = vsyncpa [#allocation6], 1
    %988 = vsyncpa [#allocation4], 1

</llo_original>
